<compile_context>
chip_gen: v6e
topology: v6e:2x2x1
jax: 0.10.0
libtpu: 0.0.40
codegen_flags: <defaults>
</compile_context>

<pallas_src>
import functools

import jax
import jax.numpy as jnp
from jax import lax
from jax.experimental import pallas as pl
from jax.experimental.pallas import tpu as pltpu

_LANE = 128  # TPU vreg lane width; last block dim kept a multiple of this.


def _cam_kernel(gamma_ref, q_ref, k_ref, v_ref, o_ref, energy_ref, *, nt):
    """Two-pass channel attention for one batch item.

    Grid = (B, 2*nt).  t < nt: accumulate energy; at t == nt-1 convert the
    scratch to attention; t >= nt: emit gamma * (attn @ v_tile) + v_tile.
    """
    t = pl.program_id(1)

    # ----------------------- pass 1: energy accumulation --------------------
    @pl.when(t < nt)
    def _pass1():
        @pl.when(t == 0)
        def _init():
            energy_ref[...] = jnp.zeros_like(energy_ref)

        q = q_ref[0]  # (C, TN)
        k = k_ref[0]  # (C, TN)
        # Contract the spatial axis of both operands directly (== q @ k.T)
        # without materializing a transpose of k through the XLU.
        energy_ref[...] += lax.dot_general(
            q, k,
            dimension_numbers=(((1,), (1,)), ((), ())),
            preferred_element_type=jnp.float32)

        @pl.when(t == nt - 1)
        def _softmax():
            energy = energy_ref[...]  # (C, C) f32
            # PyTorch: softmax(rowmax(E) - E).  Softmax is shift-invariant per
            # row, so softmax(rowmin(E) - E) is identical, already stabilized
            # (exponent args <= 0) and needs only one row reduction.
            e_min = jnp.min(energy, axis=-1, keepdims=True)
            p = jnp.exp(e_min - energy)
            denom = jnp.sum(p, axis=-1, keepdims=True)
            # approx reciprocal -> EUP slot; plenty for a softmax normalizer.
            energy_ref[...] = p * pl.reciprocal(denom, approx=True)

    # ----------------------- pass 2: output tiles ----------------------------
    @pl.when(t >= nt)
    def _pass2():
        v = v_ref[0]            # (C, TN), input dtype
        attn = energy_ref[...]  # (C, C) f32
        # Feed the MXU operands in the input dtype (bf16 inputs -> bf16 MXU,
        # f32 inputs stay exact); accumulate in f32.
        out = jnp.dot(attn.astype(v.dtype), v,
                      preferred_element_type=jnp.float32)
        gamma = gamma_ref[0]
        o_ref[0] = (gamma * out + v.astype(jnp.float32)).astype(o_ref.dtype)


def cam_module_forward(q, k, v, gamma, *, n_tile=512):
    """Channel attention module (CAM_Module) forward.

    q, k, v: (B, C, H, W) arrays (NCHW, same as the PyTorch module).
    gamma:   scalar / (1,) parameter.
    Returns: (B, C, H, W): gamma * (softmax(max(E) - E) @ v_flat) + v.
    """
    B, C, H, W = q.shape
    N = H * W
    dtype = q.dtype

    # Spatial tile: multiple of 128 lanes, capped so the resident working set
    # (q/k/v/out tiles x 2 buffers + (C, C) scratch) stays small everywhere.
    n_pad128 = ((N + _LANE - 1) // _LANE) * _LANE
    tn = min(int(n_tile), n_pad128)
    tn = max(_LANE, (tn // _LANE) * _LANE)
    nt = (N + tn - 1) // tn
    n_padded = nt * tn

    def _flat(x):
        xf = x.reshape(B, C, N)
        if n_padded != N:
            # Zero padding is exact: padded columns contribute 0 to the energy
            # accumulation and the padded output columns are sliced off below.
            xf = jnp.pad(xf, ((0, 0), (0, 0), (0, n_padded - N)))
        return xf

    qf, kf, vf = _flat(q), _flat(k), _flat(v)
    gamma_arr = jnp.asarray(gamma, dtype=jnp.float32).reshape((1,))

    itemsize = jnp.dtype(dtype).itemsize
    resident = 2 * 4 * C * tn * itemsize + C * C * 4  # dbl-buffered tiles + scratch
    vmem_limit = int(min(64 * 1024 * 1024, max(2 * resident, 16 * 1024 * 1024)))

    # Index maps (the scalar-prefetch gamma ref arrives as a trailing arg).
    # During pass 2, q/k stay pinned on their last tile (no redundant refetch);
    # during pass 1, v/out stay pinned on tile 0.
    def _qk_index(b, t, _gamma):
        return (b, 0, jnp.minimum(t, nt - 1))

    def _vo_index(b, t, _gamma):
        return (b, 0, jnp.maximum(t - nt, 0))

    grid_spec = pltpu.PrefetchScalarGridSpec(
        num_scalar_prefetch=1,
        grid=(B, 2 * nt),
        in_specs=[
            pl.BlockSpec((1, C, tn), _qk_index),   # q
            pl.BlockSpec((1, C, tn), _qk_index),   # k
            pl.BlockSpec((1, C, tn), _vo_index),   # v
        ],
        out_specs=pl.BlockSpec((1, C, tn), _vo_index),
        scratch_shapes=[pltpu.VMEM((C, C), jnp.float32)],
    )

    out_flat = pl.pallas_call(
        functools.partial(_cam_kernel, nt=nt),
        out_shape=jax.ShapeDtypeStruct((B, C, n_padded), dtype),
        grid_spec=grid_spec,
        compiler_params=pltpu.CompilerParams(
            dimension_semantics=("parallel", "arbitrary"),
            vmem_limit_bytes=vmem_limit,
        ),
    )(gamma_arr, qf, kf, vf)

    if n_padded != N:
        out_flat = out_flat[:, :, :N]
    return out_flat.reshape(B, C, H, W)


def _cam_reference(q, k, v, gamma):
    """Pure-JAX reference mirroring the PyTorch forward, for verification."""
    B, C, H, W = q.shape
    N = H * W
    qf = q.reshape(B, C, N).astype(jnp.float32)
    kf = k.reshape(B, C, N).astype(jnp.float32)
    vf = v.reshape(B, C, N).astype(jnp.float32)
    energy = jnp.einsum('bcn,bdn->bcd', qf, kf)
    energy_new = jnp.max(energy, axis=-1, keepdims=True) - energy
    attn = jax.nn.softmax(energy_new, axis=-1)
    out = jnp.einsum('bcd,bdn->bcn', attn, vf)
    return (gamma * out + vf).reshape(B, C, H, W).astype(q.dtype)


if __name__ == "__main__":
    key = jax.random.PRNGKey(0)

    def _run_case(B, C, H, W, n_tile):
        kq, kk, kv = jax.random.split(jax.random.fold_in(key, B * 1000 + H), 3)
        q = jax.random.normal(kq, (B, C, H, W), dtype=jnp.float32)
        k = jax.random.normal(kk, (B, C, H, W), dtype=jnp.float32)
        v = jax.random.normal(kv, (B, C, H, W), dtype=jnp.float32)
        # Module init is gamma = zeros(1); use a nonzero value so the attention
        # path actually contributes to the output.
        gamma = jnp.array([0.5], dtype=jnp.float32)

        out = jax.block_until_ready(
            cam_module_forward(q, k, v, gamma, n_tile=n_tile))
        ref = _cam_reference(q, k, v, gamma)
        assert out.shape == (B, C, H, W)
        # approx reciprocal in the softmax -> allow ~1e-3-level relative slack.
        assert jnp.allclose(out, ref, atol=5e-3, rtol=5e-3), \
            f"mismatch vs reference for shape {(B, C, H, W)}"

    # Single-tile case: N = 16*16 = 256 -> one 256-lane tile per pass.
    _run_case(2, 4, 16, 16, n_tile=512)
    # Multi-tile + padded case: N = 18*18 = 324 -> 3 tiles of 128 (pad to 384).
    _run_case(2, 8, 18, 18, n_tile=128)

    print("KERNEL_OK")
</pallas_src>

<mosaic_0001>
module attributes {stable_mosaic.version = 11 : i64} {
  func.func @_cam_kernel(%arg0: i32, %arg1: i32, %arg2: memref<1xf32, #tpu.memory_space<smem>>, %arg3: memref<1x4x256xf32, #tpu.memory_space<vmem>>, %arg4: memref<1x4x256xf32, #tpu.memory_space<vmem>>, %arg5: memref<1x4x256xf32, #tpu.memory_space<vmem>>, %arg6: memref<1x4x256xf32, #tpu.memory_space<vmem>>, %arg7: memref<4x4xf32, #tpu.memory_space<vmem>>) attributes {dimension_semantics = [#tpu.dimension_semantics<parallel>, #tpu.dimension_semantics<arbitrary>], iteration_bounds = array<i64: 2, 2>, scalar_prefetch = 1 : i64, scratch_operands = 1 : i64, tpu.core_type = #tpu.core_type<tc>, window_params = [{transform_indices = @transform_0, window_bounds = array<i64: 1, 4, 256>}, {transform_indices = @transform_1, window_bounds = array<i64: 1, 4, 256>}, {transform_indices = @transform_2, window_bounds = array<i64: 1, 4, 256>}, {transform_indices = @transform_3, window_bounds = array<i64: 1, 4, 256>}]} {
    %c1_i32 = arith.constant 1 : i32
    %0 = arith.cmpi slt, %arg1, %c1_i32 : i32
    %1 = arith.extui %0 : i1 to i32
    %c0_i32 = arith.constant 0 : i32
    %2 = arith.cmpi ne, %1, %c0_i32 : i32
    scf.if %2 {
      %c0_i32_2 = arith.constant 0 : i32
      %6 = arith.cmpi eq, %arg1, %c0_i32_2 : i32
      %7 = arith.extui %6 : i1 to i32
      %c0_i32_3 = arith.constant 0 : i32
      %8 = arith.cmpi ne, %7, %c0_i32_3 : i32
      scf.if %8 {
        %cst_15 = arith.constant 0.000000e+00 : f32
        %20 = vector.broadcast %cst_15 : f32 to vector<4x4xf32>
        %c0_16 = arith.constant 0 : index
        %c0_17 = arith.constant 0 : index
        %21 = vector.load %arg7[%c0_16, %c0_17] : memref<4x4xf32, #tpu.memory_space<vmem>>, vector<4x4xf32>
        tpu.vector_store %arg7[%c0_16, %c0_17], %20 {strides = array<i32>} : memref<4x4xf32, #tpu.memory_space<vmem>>, vector<4x4xf32>,
      } else {
      }
      %c0 = arith.constant 0 : index
      %c0_4 = arith.constant 0 : index
      %c0_5 = arith.constant 0 : index
      %9 = vector.load %arg3[%c0, %c0_4, %c0_5] : memref<1x4x256xf32, #tpu.memory_space<vmem>>, vector<1x4x256xf32>
      %10 = vector.shape_cast %9 : vector<1x4x256xf32> to vector<4x256xf32>
      %c0_6 = arith.constant 0 : index
      %c0_7 = arith.constant 0 : index
      %c0_8 = arith.constant 0 : index
      %11 = vector.load %arg4[%c0_6, %c0_7, %c0_8] : memref<1x4x256xf32, #tpu.memory_space<vmem>>, vector<1x4x256xf32>
      %12 = vector.shape_cast %11 : vector<1x4x256xf32> to vector<4x256xf32>
      %c0_9 = arith.constant 0 : index
      %c0_10 = arith.constant 0 : index
      %13 = vector.load %arg7[%c0_9, %c0_10] : memref<4x4xf32, #tpu.memory_space<vmem>>, vector<4x4xf32>
      %cst = arith.constant dense<0.000000e+00> : vector<4x4xf32>
      %14 = tpu.matmul %10, %12, %cst {dimension_numbers = #tpu.dot_dimension_numbers<[1], [1], [0], [0], [0, 0, 1, 0], [], []>} : vector<4x256xf32>, vector<4x256xf32>, vector<4x4xf32> -> vector<4x4xf32>
      %15 = arith.addf %13, %14 : vector<4x4xf32>
      %c0_11 = arith.constant 0 : index
      %c0_12 = arith.constant 0 : index
      %16 = vector.load %arg7[%c0_11, %c0_12] : memref<4x4xf32, #tpu.memory_space<vmem>>, vector<4x4xf32>
      tpu.vector_store %arg7[%c0_11, %c0_12], %15 {strides = array<i32>} : memref<4x4xf32, #tpu.memory_space<vmem>>, vector<4x4xf32>,
      %c0_i32_13 = arith.constant 0 : i32
      %17 = arith.cmpi eq, %arg1, %c0_i32_13 : i32
      %18 = arith.extui %17 : i1 to i32
      %c0_i32_14 = arith.constant 0 : i32
      %19 = arith.cmpi ne, %18, %c0_i32_14 : i32
      scf.if %19 {
        %c0_15 = arith.constant 0 : index
        %c0_16 = arith.constant 0 : index
        %20 = vector.load %arg7[%c0_15, %c0_16] : memref<4x4xf32, #tpu.memory_space<vmem>>, vector<4x4xf32>
        %cst_17 = arith.constant dense<0x7F800000> : vector<4xf32>
        %21 = vector.multi_reduction <minimumf>, %20, %cst_17 [1] : vector<4x4xf32> to vector<4xf32>
        %22 = vector.shape_cast %21 : vector<4xf32> to vector<4x1xf32>
        %23 = vector.broadcast %22 : vector<4x1xf32> to vector<4x4xf32>
        %24 = arith.subf %23, %20 : vector<4x4xf32>
        %25 = math.exp %24 : vector<4x4xf32>
        %cst_18 = arith.constant dense<0.000000e+00> : vector<4xf32>
        %26 = vector.multi_reduction <add>, %25, %cst_18 [1] : vector<4x4xf32> to vector<4xf32>
        %27 = vector.shape_cast %26 : vector<4xf32> to vector<4x1xf32>
        %28 = tpu.reciprocal %27 {approx = true} : vector<4x1xf32> -> vector<4x1xf32>
        %29 = vector.broadcast %28 : vector<4x1xf32> to vector<4x4xf32>
        %30 = arith.mulf %25, %29 : vector<4x4xf32>
        %c0_19 = arith.constant 0 : index
        %c0_20 = arith.constant 0 : index
        %31 = vector.load %arg7[%c0_19, %c0_20] : memref<4x4xf32, #tpu.memory_space<vmem>>, vector<4x4xf32>
        tpu.vector_store %arg7[%c0_19, %c0_20], %30 {strides = array<i32>} : memref<4x4xf32, #tpu.memory_space<vmem>>, vector<4x4xf32>,
      } else {
      }
    } else {
    }
    %c1_i32_0 = arith.constant 1 : i32
    %3 = arith.cmpi sge, %arg1, %c1_i32_0 : i32
    %4 = arith.extui %3 : i1 to i32
    %c0_i32_1 = arith.constant 0 : i32
    %5 = arith.cmpi ne, %4, %c0_i32_1 : i32
    scf.if %5 {
      %c0 = arith.constant 0 : index
      %c0_2 = arith.constant 0 : index
      %c0_3 = arith.constant 0 : index
      %6 = vector.load %arg5[%c0, %c0_2, %c0_3] : memref<1x4x256xf32, #tpu.memory_space<vmem>>, vector<1x4x256xf32>
      %7 = vector.shape_cast %6 : vector<1x4x256xf32> to vector<4x256xf32>
      %c0_4 = arith.constant 0 : index
      %c0_5 = arith.constant 0 : index
      %8 = vector.load %arg7[%c0_4, %c0_5] : memref<4x4xf32, #tpu.memory_space<vmem>>, vector<4x4xf32>
      %cst = arith.constant dense<0.000000e+00> : vector<4x256xf32>
      %9 = tpu.matmul %8, %7, %cst {dimension_numbers = #tpu.dot_dimension_numbers<[1], [0], [0], [1], [0, 0, 1, 1], [], []>} : vector<4x4xf32>, vector<4x256xf32>, vector<4x256xf32> -> vector<4x256xf32>
      %c0_6 = arith.constant 0 : index
      %10 = memref.load %arg2[%c0_6] : memref<1xf32, #tpu.memory_space<smem>>
      %11 = vector.broadcast %10 : f32 to vector<4x256xf32>
      %12 = arith.mulf %11, %9 : vector<4x256xf32>
      %13 = arith.addf %12, %7 : vector<4x256xf32>
      %c0_7 = arith.constant 0 : index
      %c0_8 = arith.constant 0 : index
      %c0_9 = arith.constant 0 : index
      %14 = vector.load %arg6[%c0_7, %c0_8, %c0_9] : memref<1x4x256xf32, #tpu.memory_space<vmem>>, vector<1x4x256xf32>
      %15 = vector.shape_cast %14 : vector<1x4x256xf32> to vector<4x256xf32>
      %16 = vector.shape_cast %13 : vector<4x256xf32> to vector<1x4x256xf32>
      tpu.vector_store %arg6[%c0_7, %c0_8, %c0_9], %16 {strides = array<i32>} : memref<1x4x256xf32, #tpu.memory_space<vmem>>, vector<1x4x256xf32>,
    } else {
    }
    return
  }
  func.func @transform_0(%arg0: i32, %arg1: i32, %arg2: memref<1xf32, #tpu.memory_space<smem>>) -> (i32, i32, i32) {
    %c0_i32 = arith.constant 0 : i32
    %0 = arith.minsi %arg1, %c0_i32 : i32
    %c0_i32_0 = arith.constant 0 : i32
    %c0_i32_1 = arith.constant 0 : i32
    return %arg0, %c0_i32_0, %0 : i32, i32, i32
  }
  func.func @transform_1(%arg0: i32, %arg1: i32, %arg2: memref<1xf32, #tpu.memory_space<smem>>) -> (i32, i32, i32) {
    %c0_i32 = arith.constant 0 : i32
    %0 = arith.minsi %arg1, %c0_i32 : i32
    %c0_i32_0 = arith.constant 0 : i32
    %c0_i32_1 = arith.constant 0 : i32
    return %arg0, %c0_i32_0, %0 : i32, i32, i32
  }
  func.func @transform_2(%arg0: i32, %arg1: i32, %arg2: memref<1xf32, #tpu.memory_space<smem>>) -> (i32, i32, i32) {
    %c1_i32 = arith.constant 1 : i32
    %0 = arith.subi %arg1, %c1_i32 : i32
    %c0_i32 = arith.constant 0 : i32
    %1 = arith.maxsi %0, %c0_i32 : i32
    %c0_i32_0 = arith.constant 0 : i32
    %c0_i32_1 = arith.constant 0 : i32
    return %arg0, %c0_i32_0, %1 : i32, i32, i32
  }
  func.func @transform_3(%arg0: i32, %arg1: i32, %arg2: memref<1xf32, #tpu.memory_space<smem>>) -> (i32, i32, i32) {
    %c1_i32 = arith.constant 1 : i32
    %0 = arith.subi %arg1, %c1_i32 : i32
    %c0_i32 = arith.constant 0 : i32
    %1 = arith.maxsi %0, %c0_i32 : i32
    %c0_i32_0 = arith.constant 0 : i32
    %c0_i32_1 = arith.constant 0 : i32
    return %arg0, %c0_i32_0, %1 : i32, i32, i32
  }
}

</mosaic_0001>

<llo_original>
// kernel: tpu_custom_call.1
$region0: #{tpu_custom_call.1}
  #allocation0 [shape = 'u32[]', space=smem, size = 0x4, offset = 0x4, fixed_abs, tag = 'smem constant byte address 0x4 - core index']
  #allocation1 [shape = 'u32[144,128]{1,0:T(1,128)}', space=vmem, size = 0x12000, scoped, tag = 'internal scratch']
  #allocation2 [shape = 'f32[4,4]{1,0:T(4,128)}', space=vmem, size = 0x800, scoped, tag = 'scratch operand']
  #allocation3 [shape = 's32[1]{0}', space=sflag, size = 0x4, scoped, tag = 'scoped memory for tpu_custom_call.1']
  #allocation4 [shape = 'f32[1]{0:T(128)S(6)}', space=smem, size = 0x200, scoped, tag = 'prefetched SMEM operand 0']
  %s0 = inlined_call_operand.<no memory space> [shape: f32[1], index: 0, kind: input, shape index: {}]
  %s1 = inlined_call_operand.hbm [shape: f32[2,4,256], index: 1, kind: input, shape index: {}]
  %s2 = inlined_call_operand.hbm [shape: f32[2,4,256], index: 2, kind: input, shape index: {}]
  %s3 = inlined_call_operand.hbm [shape: f32[2,4,256], index: 3, kind: input, shape index: {}]
  %s4 = inlined_call_operand.hbm [shape: f32[2,4,256], index: 4, kind: output, shape index: {}]
  %s5 = sld [smem:[#allocation0]]
  $region73: #{tpu_custom_call.1} parent=0
    _
  %s7 = ssub.s32 1, %s5
  %s8 = scalar_select 0, %s7, %s5
  %9 = sst [smem:[#allocation4]] %s0
  $region1: #{tpu_custom_call.1} parent=0
    #allocation5 [shape = 'u8[8192]{0}', space=vmem, size = 0x2000, scoped, tag = 'input window, operand 1']
    #allocation6 [shape = 's32[2]{0}', space=sflag, size = 0x8, scoped, tag = 'scoped memory for tpu_custom_call.1']
    #allocation7 [shape = 's32[2]{0}', space=sflag, size = 0x8, scoped, tag = 'scoped memory for tpu_custom_call.1']
    #allocation8 [shape = 'u8[8192]{0}', space=vmem, size = 0x2000, scoped, tag = 'input window, operand 2']
    #allocation9 [shape = 's32[2]{0}', space=sflag, size = 0x8, scoped, tag = 'scoped memory for tpu_custom_call.1']
    #allocation10 [shape = 'u8[8192]{0}', space=vmem, size = 0x2000, scoped, tag = 'input window, operand 3']
    #allocation11 [shape = 'u8[8192]{0}', space=vmem, size = 0x2000, scoped, tag = 'output window, operand 0']
    %10 = vsyncpa [#allocation6], 0
    %s11 = scalar_lea.sflag [#allocation6], 1
    %12 = vsyncpa %s11, 0
    %13 = vsyncpa [#allocation9], 0
    %s14 = scalar_lea.sflag [#allocation9], 1
    %15 = vsyncpa %s14, 0
    %16 = vsyncpa [#allocation7], 0
    %s17 = scalar_lea.sflag [#allocation7], 1
    %18 = vsyncpa %s17, 0
    loop: start=0, step=1, limit=6
    $region2: #{tpu_custom_call.1} parent=1 // loop_pre_header
      _
    $region3: #{tpu_custom_call.1} parent=1 // loop_header
      %s20 = sphi 0, %s24
      %p21 = scmp.ge.s32.totalorder %s20, 6
      %s27 = sphi 0, %s39
      %s28 = sphi 0, %s35
      %s29 = sphi 0, %s27
      %s30 = sphi 0, %s28
      %s31 = sphi 0, %s29
      %s32 = sphi 0, %s30
      %s48 = sphi 0, %s50
      %s51 = sphi 0, %s48
      %s52 = sphi 0, %s51
      %s68 = sphi 0, %s52
      %s80 = sphi 0, %s82
      %s83 = sphi 0, %s80
      %s84 = sphi 0, %s83
      %s100 = sphi 0, %s84
      %s114 = sphi 0, %s116
      %s117 = sphi 0, %s114
      %s118 = sphi 0, %s117
      %s134 = sphi 0, %s118
      %s148 = sphi 0, %s150
      %s151 = sphi 0, %s148
      %s152 = sphi 0, %s151
      %s168 = sphi 0, %s152
    $region4: #{tpu_custom_call.1} parent=1 // loop_header_branch
      %23 = sbr.rel (%p21) target = $region8
    $region5: #{tpu_custom_call.1} parent=1 // loop_body
      %s25 = ssub.s32 %s20, 1
      %s26 = ssub.s32 %s20, 2
      %s33 = sadd.s32 1, %s28
      %p34 = scmp.ge.s32.totalorder %s33, 2
      %s35 = scalar_select %p34, 0, %s33
      %s36 = sadd.s32 1, %s27
      %s37 = scalar_select %p34, %s36, %s27
      %p38 = scmp.ge.s32.totalorder %s37, 2
      %s39 = scalar_select %p38, 0, %s37
      %p40 = scmp.lt.s32.totalorder %s28, 0
      %s41 = scalar_select %p40, %s28, 0
      %p42 = scmp.lt.s32.totalorder %s35, 0
      %s43 = scalar_select %p42, %s35, 0
      %s44 = ssub.s32 %s27, %s39
      %s45 = ssub.s32 %s41, %s43
      %s46 = sor.u32 %s44, %s45
      %p47 = scmp.eq.s32.totalorder %s46, 0
      %s49 = sadd.s32 %s48, 1
      %s50 = scalar_select %p47, %s48, %s49
      %p53 = pneg %p47
      %p54 = scmp.eq.s32.totalorder %s20, 3
      %p55 = por %p53, %p54
      %p56 = scmp.ne.s32.totalorder %s48, %s51
      %p57 = scmp.eq.s32.totalorder %s20, 0
      %p58 = por %p56, %p57
      %p59 = scmp.ne.s32.totalorder %s48, %s51
      %p60 = scmp.eq.s32.totalorder %s25, 3
      %p61 = por %p59, %p60
      %p62 = scmp.ne.s32.totalorder %s51, %s52
      %p63 = scmp.eq.s32.totalorder %s25, 0
      %p64 = por %p62, %p63
      %p65 = scmp.ne.s32.totalorder %s51, %s52
      %p66 = scmp.eq.s32.totalorder %s26, 3
      %p67 = por %p65, %p66
      %p69 = scmp.ne.s32.totalorder %s52, %s68
      %p70 = scmp.eq.s32.totalorder %s26, 0
      %p71 = por %p69, %p70
      %p72 = scmp.lt.s32.totalorder %s28, 0
      %s73 = scalar_select %p72, %s28, 0
      %p74 = scmp.lt.s32.totalorder %s35, 0
      %s75 = scalar_select %p74, %s35, 0
      %s76 = ssub.s32 %s27, %s39
      %s77 = ssub.s32 %s73, %s75
      %s78 = sor.u32 %s76, %s77
      %p79 = scmp.eq.s32.totalorder %s78, 0
      %s81 = sadd.s32 %s80, 1
      %s82 = scalar_select %p79, %s80, %s81
      %p85 = pneg %p79
      %p86 = scmp.eq.s32.totalorder %s20, 3
      %p87 = por %p85, %p86
      %p88 = scmp.ne.s32.totalorder %s80, %s83
      %p89 = scmp.eq.s32.totalorder %s20, 0
      %p90 = por %p88, %p89
      %p91 = scmp.ne.s32.totalorder %s80, %s83
      %p92 = scmp.eq.s32.totalorder %s25, 3
      %p93 = por %p91, %p92
      %p94 = scmp.ne.s32.totalorder %s83, %s84
      %p95 = scmp.eq.s32.totalorder %s25, 0
      %p96 = por %p94, %p95
      %p97 = scmp.ne.s32.totalorder %s83, %s84
      %p98 = scmp.eq.s32.totalorder %s26, 3
      %p99 = por %p97, %p98
      %p101 = scmp.ne.s32.totalorder %s84, %s100
      %p102 = scmp.eq.s32.totalorder %s26, 0
      %p103 = por %p101, %p102
      %s104 = ssub.s32 %s28, 1
      %p105 = scmp.gt.s32.totalorder %s104, 0
      %s106 = scalar_select %p105, %s104, 0
      %s107 = ssub.s32 %s35, 1
      %p108 = scmp.gt.s32.totalorder %s107, 0
      %s109 = scalar_select %p108, %s107, 0
      %s110 = ssub.s32 %s27, %s39
      %s111 = ssub.s32 %s106, %s109
      %s112 = sor.u32 %s110, %s111
      %p113 = scmp.eq.s32.totalorder %s112, 0
      %s115 = sadd.s32 %s114, 1
      %s116 = scalar_select %p113, %s114, %s115
      %p119 = pneg %p113
      %p120 = scmp.eq.s32.totalorder %s20, 3
      %p121 = por %p119, %p120
      %p122 = scmp.ne.s32.totalorder %s114, %s117
      %p123 = scmp.eq.s32.totalorder %s20, 0
      %p124 = por %p122, %p123
      %p125 = scmp.ne.s32.totalorder %s114, %s117
      %p126 = scmp.eq.s32.totalorder %s25, 3
      %p127 = por %p125, %p126
      %p128 = scmp.ne.s32.totalorder %s117, %s118
      %p129 = scmp.eq.s32.totalorder %s25, 0
      %p130 = por %p128, %p129
      %p131 = scmp.ne.s32.totalorder %s117, %s118
      %p132 = scmp.eq.s32.totalorder %s26, 3
      %p133 = por %p131, %p132
      %p135 = scmp.ne.s32.totalorder %s118, %s134
      %p136 = scmp.eq.s32.totalorder %s26, 0
      %p137 = por %p135, %p136
      %s138 = ssub.s32 %s28, 1
      %p139 = scmp.gt.s32.totalorder %s138, 0
      %s140 = scalar_select %p139, %s138, 0
      %s141 = ssub.s32 %s35, 1
      %p142 = scmp.gt.s32.totalorder %s141, 0
      %s143 = scalar_select %p142, %s141, 0
      %s144 = ssub.s32 %s27, %s39
      %s145 = ssub.s32 %s140, %s143
      %s146 = sor.u32 %s144, %s145
      %p147 = scmp.eq.s32.totalorder %s146, 0
      %s149 = sadd.s32 %s148, 1
      %s150 = scalar_select %p147, %s148, %s149
      %p153 = pneg %p147
      %p154 = scmp.eq.s32.totalorder %s20, 3
      %p155 = por %p153, %p154
      %p156 = scmp.ne.s32.totalorder %s148, %s151
      %p157 = scmp.eq.s32.totalorder %s20, 0
      %p158 = por %p156, %p157
      %p159 = scmp.ne.s32.totalorder %s148, %s151
      %p160 = scmp.eq.s32.totalorder %s25, 3
      %p161 = por %p159, %p160
      %p162 = scmp.ne.s32.totalorder %s151, %s152
      %p163 = scmp.eq.s32.totalorder %s25, 0
      %p164 = por %p162, %p163
      %p165 = scmp.ne.s32.totalorder %s151, %s152
      %p166 = scmp.eq.s32.totalorder %s26, 3
      %p167 = por %p165, %p166
      %p169 = scmp.ne.s32.totalorder %s152, %s168
      %p170 = scmp.eq.s32.totalorder %s26, 0
      %p171 = por %p169, %p170
      %p172 = scmp.le.s32.totalorder 1, %s20
      %p173 = scmp.lt.s32.totalorder %s20, 5
      %p174 = pnand %p172, %p173
      %p175 = pneg %p174
      // Predicated region
      $region9: #{tpu_custom_call.1} parent=5 // pred_check
        _
      $region10: #{tpu_custom_call.1} parent=5 // pred_check_branch
        %177 = sbr.rel (%p174) target = $region12
      $region11: #{tpu_custom_call.1} parent=5 // pred_region
        %s178 = ssub.s32 %s20, 1
      $region12: #{tpu_custom_call.1} parent=5 // pred_fallthru
        _
      %p179 = scmp.lt.s32.totalorder %s20, 4
      // Predicated region
      $region13: #{tpu_custom_call.1} parent=5 // pred_check
        %p180 = pneg %p179
      $region14: #{tpu_custom_call.1} parent=5 // pred_check_branch
        %182 = sbr.rel (%p180) target = $region16
      $region15: #{tpu_custom_call.1} parent=5 // pred_region
        // Predicated region
        $region17: #{tpu_custom_call.1} parent=15 // pred_check
          %p183 = pneg %p58
        $region18: #{tpu_custom_call.1} parent=15 // pred_check_branch
          %185 = sbr.rel (%p183) target = $region20
        $region19: #{tpu_custom_call.1} parent=15 // pred_region
          %s186 = sand.u32 %s48, 1
          %s187 = scalar_lea.sflag [#allocation6], %s186
          %s188 = sand.u32 %s48, 1
          %s189 = smul.addr %s188, 8
          %s190 = scalar_lea.vmem [#allocation5], %s189
          %p191 = scmp.lt.s32.totalorder %s28, 0
          %s192 = scalar_select %p191, %s28, 0
          %s193 = smul.u32 2, %s192
          %s195 = ssub.s32 128, 128
          %196 = vsyncadd %s187, %s195
          %s197 = smul.addr %s27, 2
          %s198 = sadd.s32 %s193, %s197
          %s199 = smul.addr %s198, 64
          %s200 = scalar_lea.hbm %s1, %s199
          %s202 = sshll.u32 %s190, 4
          %s203 = int_to_ptr.vmem [resolvable:$true] %s202
          %205 = dma.hbm_to_vmem [thread:$0]  %s200, 128, %s203, %s187
        $region20: #{tpu_custom_call.1} parent=15 // pred_fallthru
          _
        // Predicated region
        $region21: #{tpu_custom_call.1} parent=15 // pred_check
          %p206 = pneg %p90
        $region22: #{tpu_custom_call.1} parent=15 // pred_check_branch
          %208 = sbr.rel (%p206) target = $region24
        $region23: #{tpu_custom_call.1} parent=15 // pred_region
          %s209 = sand.u32 %s20, 1
          %s210 = scalar_lea.sflag [#allocation9], %s209
          %s211 = sand.u32 %s80, 1
          %s212 = smul.addr %s211, 8
          %s213 = scalar_lea.vmem [#allocation8], %s212
          %p214 = scmp.lt.s32.totalorder %s28, 0
          %s215 = scalar_select %p214, %s28, 0
          %s216 = smul.u32 2, %s215
          %s218 = ssub.s32 128, 128
          %219 = vsyncadd %s210, %s218
          %s220 = smul.addr %s27, 2
          %s221 = sadd.s32 %s216, %s220
          %s222 = smul.addr %s221, 64
          %s223 = scalar_lea.hbm %s2, %s222
          %s225 = sshll.u32 %s213, 4
          %s226 = int_to_ptr.vmem [resolvable:$true] %s225
          %228 = dma.hbm_to_vmem [thread:$0]  %s223, 128, %s226, %s210
        $region24: #{tpu_custom_call.1} parent=15 // pred_fallthru
          _
        // Predicated region
        $region25: #{tpu_custom_call.1} parent=15 // pred_check
          %p229 = pneg %p124
        $region26: #{tpu_custom_call.1} parent=15 // pred_check_branch
          %231 = sbr.rel (%p229) target = $region28
        $region27: #{tpu_custom_call.1} parent=15 // pred_region
          %s232 = sand.u32 %s20, 1
          %s233 = scalar_lea.sflag [#allocation9], %s232
          %s234 = sand.u32 %s114, 1
          %s235 = smul.addr %s234, 8
          %s236 = scalar_lea.vmem [#allocation10], %s235
          %s237 = ssub.s32 %s28, 1
          %p238 = scmp.gt.s32.totalorder %s237, 0
          %s239 = scalar_select %p238, %s237, 0
          %s240 = smul.u32 2, %s239
          %s242 = ssub.s32 128, 128
          %243 = vsyncadd %s233, %s242
          %s244 = smul.addr %s27, 2
          %s245 = sadd.s32 %s240, %s244
          %s246 = smul.addr %s245, 64
          %s247 = scalar_lea.hbm %s3, %s246
          %s249 = sshll.u32 %s236, 4
          %s250 = int_to_ptr.vmem [resolvable:$true] %s249
          %252 = dma.hbm_to_vmem [thread:$0]  %s247, 128, %s250, %s233
        $region28: #{tpu_custom_call.1} parent=15 // pred_fallthru
          _
      $region16: #{tpu_custom_call.1} parent=5 // pred_fallthru
        _
      %p253 = scmp.le.s32.totalorder 1, %s20
      %p254 = scmp.lt.s32.totalorder %s20, 5
      %p255 = pnand %p253, %p254
      %p256 = pneg %p255
      // Predicated region
      $region29: #{tpu_custom_call.1} parent=5 // pred_check
        _
      $region30: #{tpu_custom_call.1} parent=5 // pred_check_branch
        %258 = sbr.rel (%p255) target = $region32
      $region31: #{tpu_custom_call.1} parent=5 // pred_region
        %s259 = ssub.s32 %s20, 1
        %s260 = sand.u32 %s51, 1
        %s261 = scalar_lea.sflag [#allocation6], %s260
        %s262 = sand.u32 %s51, 1
        %s263 = smul.addr %s262, 8
        %s264 = scalar_lea.vmem [#allocation5], %s263
        // Predicated region
        $region33: #{tpu_custom_call.1} parent=31 // pred_check
          %p265 = pneg %p64
        $region34: #{tpu_custom_call.1} parent=31 // pred_check_branch
          %267 = sbr.rel (%p265) target = $region36
        $region35: #{tpu_custom_call.1} parent=31 // pred_region
          %268 = dma.done %s261, 128
        $region36: #{tpu_custom_call.1} parent=31 // pred_fallthru
          _
        %s269 = sand.u32 %s25, 1
        %s270 = scalar_lea.sflag [#allocation9], %s269
        %s271 = sand.u32 %s83, 1
        %s272 = smul.addr %s271, 8
        %s273 = scalar_lea.vmem [#allocation8], %s272
        // Predicated region
        $region37: #{tpu_custom_call.1} parent=31 // pred_check
          %p274 = pneg %p96
        $region38: #{tpu_custom_call.1} parent=31 // pred_check_branch
          %276 = sbr.rel (%p274) target = $region40
        $region39: #{tpu_custom_call.1} parent=31 // pred_region
          %277 = dma.done %s270, 128
        $region40: #{tpu_custom_call.1} parent=31 // pred_fallthru
          _
        %s278 = sand.u32 %s25, 1
        %s279 = scalar_lea.sflag [#allocation9], %s278
        %s280 = sand.u32 %s117, 1
        %s281 = smul.addr %s280, 8
        %s282 = scalar_lea.vmem [#allocation10], %s281
        // Predicated region
        $region41: #{tpu_custom_call.1} parent=31 // pred_check
          %p283 = pneg %p130
        $region42: #{tpu_custom_call.1} parent=31 // pred_check_branch
          %285 = sbr.rel (%p283) target = $region44
        $region43: #{tpu_custom_call.1} parent=31 // pred_region
          %286 = dma.done %s279, 128
        $region44: #{tpu_custom_call.1} parent=31 // pred_fallthru
          _
        %s287 = sand.u32 %s51, 1
        %s288 = scalar_lea.sflag [#allocation6], %s287
        %s289 = sand.u32 %s51, 1
        %s290 = smul.addr %s289, 8
        %s291 = scalar_lea.vmem [#allocation5], %s290
        %p292 = pneg %p64
        %p293 = pneg %p61
        %s294 = sand.u32 %s25, 1
        %s295 = scalar_lea.sflag [#allocation9], %s294
        %s296 = sand.u32 %s83, 1
        %s297 = smul.addr %s296, 8
        %s298 = scalar_lea.vmem [#allocation8], %s297
        %p299 = pneg %p96
        %p300 = pneg %p93
        %s301 = sand.u32 %s25, 1
        %s302 = scalar_lea.sflag [#allocation9], %s301
        %s303 = sand.u32 %s117, 1
        %s304 = smul.addr %s303, 8
        %s305 = scalar_lea.vmem [#allocation10], %s304
        %p306 = pneg %p130
        %p307 = pneg %p127
        %p308 = pneg %p164
        %p309 = pneg %p161
        %s310 = sand.u32 %s151, 1
        %s311 = scalar_lea.sflag [#allocation7], %s310
        %s312 = sand.u32 %s151, 1
        %s313 = smul.addr %s312, 8
        %s314 = scalar_lea.vmem [#allocation11], %s313
        %p315 = scmp.lt.s32.totalorder %s30, 0
        %s316 = scalar_select %p315, %s30, 0
        %s317 = smul.u32 2, %s316
        %p318 = scmp.lt.s32.totalorder %s30, 0
        %s319 = scalar_select %p318, %s30, 0
        %s320 = smul.u32 2, %s319
        %s321 = ssub.s32 %s30, 1
        %p322 = scmp.gt.s32.totalorder %s321, 0
        %s323 = scalar_select %p322, %s321, 0
        %s324 = smul.u32 2, %s323
        %s325 = ssub.s32 %s30, 1
        %p326 = scmp.gt.s32.totalorder %s325, 0
        %s327 = scalar_select %p326, %s325, 0
        %s328 = smul.u32 2, %s327
        %p329 = scmp.lt.s32.totalorder %s30, 1
        // Predicated region
        $region45: #{tpu_custom_call.1} parent=31 // pred_check
          %p330 = pneg %p329
        $region46: #{tpu_custom_call.1} parent=31 // pred_check_branch
          %332 = sbr.rel (%p330) target = $region48
        $region47: #{tpu_custom_call.1} parent=31 // pred_region
          %p333 = scmp.eq.s32.totalorder %s30, 0
          // Predicated region
          $region49: #{tpu_custom_call.1} parent=47 // pred_check
            %p334 = pneg %p333
          $region50: #{tpu_custom_call.1} parent=47 // pred_check_branch
            %336 = sbr.rel (%p334) target = $region52
          $region51: #{tpu_custom_call.1} parent=47 // pred_region
            %vm337 = vcmask 27648
            %338 = vst.msk [vmem:[#allocation2] sm:$0xf] %vm337, 0.0
          $region52: #{tpu_custom_call.1} parent=47 // pred_fallthru
            _
          %v339 = vld [vmem:[%s264] sm:$0xff]
          %v340 = vld [vmem:[%s273] sm:$0xff]
          %v341 = vld [vmem:[#allocation2] sm:$0xf]
          %v343 = vcombine.high %v339, %v339
          %v346 = vcombine.high %v340, %v340
          %348 = vmatprep.subr.mxu0 0.0
          %349 = vmatpush1.xpose.msra.mxu0 0.0
          %350 = vmatprep.subr.mxu0 0.0
          %351 = vmatpush1.xpose.msra.mxu0 0.0
          %352 = vmatprep.subr.mxu0 0.0
          %353 = vmatpush1.xpose.msra.mxu0 0.0
          %354 = vmatprep.subr.mxu0 0.0
          %355 = vmatpush1.xpose.msra.mxu0 0.0
          %356 = vmatprep.subr.mxu0 0.0
          %357 = vmatpush1.xpose.msra.mxu0 0.0
          %358 = vmatprep.subr.mxu0 0.0
          %359 = vmatpush1.xpose.msra.mxu0 0.0
          %360 = vmatprep.subr.mxu0 0.0
          %361 = vmatpush1.xpose.msra.mxu0 0.0
          %362 = vmatprep.subr.mxu0 0.0
          %363 = vmatpush1.xpose.msra.mxu0 0.0
          %364 = vmatprep.subr.mxu0 0.0
          %365 = vmatpush1.xpose.msra.mxu0 0.0
          %366 = vmatprep.subr.mxu0 0.0
          %367 = vmatpush1.xpose.msra.mxu0 0.0
          %368 = vmatprep.subr.mxu0 0.0
          %369 = vmatpush1.xpose.msra.mxu0 0.0
          %370 = vmatprep.subr.mxu0 0.0
          %371 = vmatpush1.xpose.msra.mxu0 0.0
          %372 = vmatprep.subr.mxu0 0.0
          %373 = vmatpush1.xpose.msra.mxu0 0.0
          %374 = vmatprep.subr.mxu0 0.0
          %375 = vmatpush1.xpose.msra.mxu0 0.0
          %376 = vmatprep.subr.mxu0 0.0
          %377 = vmatpush1.xpose.msra.mxu0 0.0
          %378 = vmatprep.subr.mxu0 %v346
          %379 = vmatpush1.xpose.msra.mxu0 %v340
          %380 = vmatprep.subr.mxu0 0.0
          %381 = vmatpush2.xpose.msra.mxu0 0.0
          %382 = vmatprep.subr.mxu0 0.0
          %383 = vmatpush2.xpose.msra.mxu0 0.0
          %384 = vmatprep.subr.mxu0 0.0
          %385 = vmatpush2.xpose.msra.mxu0 0.0
          %386 = vmatprep.subr.mxu0 0.0
          %387 = vmatpush2.xpose.msra.mxu0 0.0
          %388 = vmatprep.subr.mxu0 0.0
          %389 = vmatpush2.xpose.msra.mxu0 0.0
          %390 = vmatprep.subr.mxu0 0.0
          %391 = vmatpush2.xpose.msra.mxu0 0.0
          %392 = vmatprep.subr.mxu0 0.0
          %393 = vmatpush2.xpose.msra.mxu0 0.0
          %394 = vmatprep.subr.mxu0 0.0
          %395 = vmatpush2.xpose.msra.mxu0 0.0
          %396 = vmatprep.subr.mxu0 0.0
          %397 = vmatpush2.xpose.msra.mxu0 0.0
          %398 = vmatprep.subr.mxu0 0.0
          %399 = vmatpush2.xpose.msra.mxu0 0.0
          %400 = vmatprep.subr.mxu0 0.0
          %401 = vmatpush2.xpose.msra.mxu0 0.0
          %402 = vmatprep.subr.mxu0 0.0
          %403 = vmatpush2.xpose.msra.mxu0 0.0
          %404 = vmatprep.subr.mxu0 0.0
          %405 = vmatpush2.xpose.msra.mxu0 0.0
          %406 = vmatprep.subr.mxu0 0.0
          %407 = vmatpush2.xpose.msra.mxu0 0.0
          %408 = vmatprep.subr.mxu0 0.0
          %409 = vmatpush2.xpose.msra.mxu0 0.0
          %410 = vmatprep.subr.mxu0 0.0
          %411 = vmatpush2.xpose.msra.mxu0 0.0
          %412 = vmatprep.mubr.f32.mxu0 %v343
          %413 = vmatmul.mubr.f32.gmra.mxu0 %v339
          %v414 = vpop.f32.mrf.mxu0
          %v415 = vadd.f32 0.0, %v414
          %v416 = vpop.f32.mrf.mxu0
          %417 = vdwg.mxu0
          %v418 = vadd.f32 %v341, %v415
          %vm419 = vcmask 27648
          %420 = vst.msk [vmem:[#allocation2] sm:$0xf] %vm419, %v418
          // Predicated region
          $region53: #{tpu_custom_call.1} parent=47 // pred_check
            %p421 = pneg %p333
          $region54: #{tpu_custom_call.1} parent=47 // pred_check_branch
            %423 = sbr.rel (%p421) target = $region56
          $region55: #{tpu_custom_call.1} parent=47 // pred_region
            %v424 = vld [vmem:[#allocation2] sm:$0xf]
            %v425 = vsel %vm419, %v424, inf
            %426 = vmin.xlane.f32.xlu0 %v425
            %v427 = vpop.xlane.xlu0 %426
            %v428 = vsub.f32 %v427, %v424
            %v429 = vmul.f32 %v428, 1.442695
            %v430 = vpow.pop %v429
            %v431 = vsel %vm419, %v430, 0.0
            %432 = vadd.xlane.f32.xlu0 %v431
            %v433 = vpop.xlane.xlu0 %432
            %v434 = vrcp.pop %v433
            %v435 = vmul.f32 %v430, %v434
            %436 = vst.msk [vmem:[#allocation2] sm:$0xf] %vm419, %v435
          $region56: #{tpu_custom_call.1} parent=47 // pred_fallthru
            _
        $region48: #{tpu_custom_call.1} parent=31 // pred_fallthru
          _
        %p437 = scmp.ge.s32.totalorder %s30, 1
        // Predicated region
        $region57: #{tpu_custom_call.1} parent=31 // pred_check
          %p438 = pneg %p437
        $region58: #{tpu_custom_call.1} parent=31 // pred_check_branch
          %440 = sbr.rel (%p438) target = $region60
        $region59: #{tpu_custom_call.1} parent=31 // pred_region
          %v441 = vld [vmem:[%s282] sm:$0xff]
          %v442 = vld [vmem:[#allocation2] sm:$0xf]
          %v444 = vcombine.high %v441, %v441
          %vm445 = vcmask 31744
          %v447 = vsel %vm445, %v442, 0
          %vm449 = vcmask 1043456
          %v450 = vsel %vm449, %v441, 0
          %v452 = vsel %vm449, %v444, 0
          %454 = vmatprep.subr.mxu0 0.0
          %455 = vmatpush1.msra.mxu0 0.0
          %456 = vmatprep.subr.mxu0 0.0
          %457 = vmatpush1.msra.mxu0 0.0
          %458 = vmatprep.subr.mxu0 0.0
          %459 = vmatpush1.msra.mxu0 0.0
          %460 = vmatprep.subr.mxu0 0.0
          %461 = vmatpush1.msra.mxu0 0.0
          %462 = vmatprep.subr.mxu0 0.0
          %463 = vmatpush1.msra.mxu0 0.0
          %464 = vmatprep.subr.mxu0 0.0
          %465 = vmatpush1.msra.mxu0 0.0
          %466 = vmatprep.subr.mxu0 0.0
          %467 = vmatpush1.msra.mxu0 0.0
          %468 = vmatprep.subr.mxu0 0.0
          %469 = vmatpush1.msra.mxu0 0.0
          %470 = vmatprep.subr.mxu0 0.0
          %471 = vmatpush1.msra.mxu0 0.0
          %472 = vmatprep.subr.mxu0 0.0
          %473 = vmatpush1.msra.mxu0 0.0
          %474 = vmatprep.subr.mxu0 0.0
          %475 = vmatpush1.msra.mxu0 0.0
          %476 = vmatprep.subr.mxu0 0.0
          %477 = vmatpush1.msra.mxu0 0.0
          %478 = vmatprep.subr.mxu0 0.0
          %479 = vmatpush1.msra.mxu0 0.0
          %480 = vmatprep.subr.mxu0 0.0
          %481 = vmatpush1.msra.mxu0 0.0
          %482 = vmatprep.subr.mxu0 0.0
          %483 = vmatpush1.msra.mxu0 0.0
          %484 = vmatprep.subr.mxu0 %v452
          %485 = vmatpush1.msra.mxu0 %v450
          %486 = vmatprep.subr.mxu0 0.0
          %487 = vmatpush2.msra.mxu0 0.0
          %488 = vmatprep.subr.mxu0 0.0
          %489 = vmatpush2.msra.mxu0 0.0
          %490 = vmatprep.subr.mxu0 0.0
          %491 = vmatpush2.msra.mxu0 0.0
          %492 = vmatprep.subr.mxu0 0.0
          %493 = vmatpush2.msra.mxu0 0.0
          %494 = vmatprep.subr.mxu0 0.0
          %495 = vmatpush2.msra.mxu0 0.0
          %496 = vmatprep.subr.mxu0 0.0
          %497 = vmatpush2.msra.mxu0 0.0
          %498 = vmatprep.subr.mxu0 0.0
          %499 = vmatpush2.msra.mxu0 0.0
          %500 = vmatprep.subr.mxu0 0.0
          %501 = vmatpush2.msra.mxu0 0.0
          %502 = vmatprep.subr.mxu0 0.0
          %503 = vmatpush2.msra.mxu0 0.0
          %504 = vmatprep.subr.mxu0 0.0
          %505 = vmatpush2.msra.mxu0 0.0
          %506 = vmatprep.subr.mxu0 0.0
          %507 = vmatpush2.msra.mxu0 0.0
          %508 = vmatprep.subr.mxu0 0.0
          %509 = vmatpush2.msra.mxu0 0.0
          %510 = vmatprep.subr.mxu0 0.0
          %511 = vmatpush2.msra.mxu0 0.0
          %512 = vmatprep.subr.mxu0 0.0
          %513 = vmatpush2.msra.mxu0 0.0
          %514 = vmatprep.subr.mxu0 0.0
          %515 = vmatpush2.msra.mxu0 0.0
          %516 = vmatprep.subr.mxu0 0.0
          %517 = vmatpush2.msra.mxu0 0.0
          %518 = vmatprep.mubr.f32.mxu0 0.0
          %519 = vmatmul.mubr.f32.gmra.mxu0 %v447
          %v520 = vpop.f32.mrf.mxu0
          %v521 = vadd.f32 0.0, %v520
          %v522 = vpop.f32.mrf.mxu0
          %v523 = vadd.f32 0.0, %v522
          %524 = vdwg.mxu0
          %s525 = sld [smem:[#allocation4]]
          %v526 = vstv %s525
          %v527 = vmul.f32 %v526, %v521
          %v528 = vmul.f32 %v526, %v523
          %v530 = vadd.f32 %v527, %v441
          %v531 = vadd.f32 %v528, %v444
          %v534 = vcombine.low %v530, %v531
          %536 = vst [vmem:[%s314] sm:$0xff] %v534
        $region60: #{tpu_custom_call.1} parent=31 // pred_fallthru
          _
        %s537 = sand.u32 %s151, 1
        %s538 = scalar_lea.sflag [#allocation7], %s537
        %s539 = sand.u32 %s151, 1
        %s540 = smul.addr %s539, 8
        %s541 = scalar_lea.vmem [#allocation11], %s540
        // Predicated region
        $region61: #{tpu_custom_call.1} parent=31 // pred_check
          %p542 = pneg %p161
        $region62: #{tpu_custom_call.1} parent=31 // pred_check_branch
          %544 = sbr.rel (%p542) target = $region64
        $region63: #{tpu_custom_call.1} parent=31 // pred_region
          %s545 = ssub.s32 %s30, 1
          %p546 = scmp.gt.s32.totalorder %s545, 0
          %s547 = scalar_select %p546, %s545, 0
          %s548 = smul.u32 2, %s547
          %s550 = ssub.s32 128, 128
          %551 = vsyncadd %s538, %s550
          %s552 = smul.addr %s29, 2
          %s553 = sadd.s32 %s548, %s552
          %s554 = smul.addr %s553, 64
          %s555 = scalar_lea.hbm %s4, %s554
          %s557 = sshll.u32 %s541, 4
          %s558 = int_to_ptr.vmem [resolvable:$true] %s557
          %560 = dma.vmem_to_hbm [thread:$0]  %s558, 128, %s555, %s538
        $region64: #{tpu_custom_call.1} parent=31 // pred_fallthru
          _
      $region32: #{tpu_custom_call.1} parent=5 // pred_fallthru
        _
      %p561 = scmp.le.s32.totalorder 2, %s20
      // Predicated region
      $region65: #{tpu_custom_call.1} parent=5 // pred_check
        %p562 = pneg %p561
      $region66: #{tpu_custom_call.1} parent=5 // pred_check_branch
        %564 = sbr.rel (%p562) target = $region68
      $region67: #{tpu_custom_call.1} parent=5 // pred_region
        %s565 = ssub.s32 %s20, 2
        // Predicated region
        $region69: #{tpu_custom_call.1} parent=67 // pred_check
          %p566 = pneg %p167
        $region70: #{tpu_custom_call.1} parent=67 // pred_check_branch
          %568 = sbr.rel (%p566) target = $region72
        $region71: #{tpu_custom_call.1} parent=67 // pred_region
          %s569 = sand.u32 %s152, 1
          %s570 = scalar_lea.sflag [#allocation7], %s569
          %s571 = sand.u32 %s152, 1
          %s572 = smul.addr %s571, 8
          %s573 = scalar_lea.vmem [#allocation11], %s572
          %574 = dma.done %s570, 128
        $region72: #{tpu_custom_call.1} parent=67 // pred_fallthru
          _
      $region68: #{tpu_custom_call.1} parent=5 // pred_fallthru
        _
    $region6: #{tpu_custom_call.1} parent=1 // loop_footer
      %s24 = sadd.s32 1, %s20
    $region7: #{tpu_custom_call.1} parent=1 // loop_footer_branch
      %19 = sbr.rel target = $region3
    $region8: #{tpu_custom_call.1} parent=1 // loop_exit
      _
    %575 = vsyncpa [#allocation6], 1
    %s576 = scalar_lea.sflag [#allocation6], 1
    %577 = vsyncpa %s576, 1
    %578 = vsyncpa [#allocation9], 1
    %s579 = scalar_lea.sflag [#allocation9], 1
    %580 = vsyncpa %s579, 1
    %581 = vsyncpa [#allocation7], 1
    %s582 = scalar_lea.sflag [#allocation7], 1
    %583 = vsyncpa %s582, 1

</llo_original>
